<compile_context>
chip_gen: v5e
topology: v5e:2x2
jax: 0.10.0
libtpu: 0.0.40
codegen_flags: <defaults>
</compile_context>

<pallas_src>
import functools

import jax
import jax.numpy as jnp
from jax import lax
from jax.experimental import pallas as pl
from jax.experimental.pallas import tpu as pltpu


def _round_up(a, b):
    return ((a + b - 1) // b) * b


def hard_triplet_kernel(xi_ref, xj_ref, sqi_ref, sqj_ref, ti_ref, tj_ref,
                        vi_ref, vj_ref, out_ref, ap2_acc, an2_acc, *,
                        margin, gram_dtype):
    # xi_ref : (TM, F)  anchor-row feature tile            (f32, VMEM)
    # xj_ref : (TN, F)  candidate-row feature tile         (f32, VMEM)
    # sqi_ref: (TM, 1)  ||x_i||^2 column                   (f32)
    # sqj_ref: (1, TN)  ||x_j||^2 row                      (f32)
    # ti_ref : (TM, 1)  labels column                      (i32)
    # tj_ref : (1, TN)  labels row                         (i32)
    # vi_ref : (TM, 1)  anchor validity (1.0 real / 0.0 pad)
    # vj_ref : (1, TN)  candidate validity
    # out_ref: (1, 128) lane-dense per-row-block partial loss sum
    # ap2_acc, an2_acc: (TM, 1) f32 running hardest-pos / hardest-neg squared dists
    j = pl.program_id(1)
    nj = pl.num_programs(1)

    @pl.when(j == 0)
    def _init():
        ap2_acc[...] = jnp.full(ap2_acc.shape, -jnp.inf, dtype=jnp.float32)
        an2_acc[...] = jnp.full(an2_acc.shape, jnp.inf, dtype=jnp.float32)

    xi = xi_ref[...]
    xj = xj_ref[...]
    if gram_dtype != jnp.float32:
        xi = xi.astype(gram_dtype)
        xj = xj.astype(gram_dtype)

    # gram[i, j] = <x_i, x_j>  — contract feature dim of both tiles (no transpose).
    gram = lax.dot_general(xi, xj, (((1,), (1,)), ((), ())),
                           preferred_element_type=jnp.float32)        # (TM, TN)

    # Squared pairwise distances (clamped for numerical safety). Never take sqrt here.
    dist2 = sqi_ref[...] + sqj_ref[...] - 2.0 * gram                  # (TM, TN)
    dist2 = jnp.maximum(dist2, 0.0)

    same = ti_ref[...] == tj_ref[...]                                 # (TM, TN) bool
    col_valid = vj_ref[...] > 0.5                                     # (1, TN)  bool

    pos_mask = jnp.logical_and(same, col_valid)
    neg_mask = jnp.logical_and(jnp.logical_not(same), col_valid)

    ap2_acc[...] = jnp.maximum(
        ap2_acc[...],
        jnp.max(jnp.where(pos_mask, dist2, -jnp.inf), axis=1, keepdims=True))
    an2_acc[...] = jnp.minimum(
        an2_acc[...],
        jnp.min(jnp.where(neg_mask, dist2, jnp.inf), axis=1, keepdims=True))

    @pl.when(j == nj - 1)
    def _finalize():
        # sqrt only on the 2*TM selected values (monotone => same arg-selection).
        d_ap = jnp.sqrt(jnp.maximum(ap2_acc[...], 0.0))               # (TM, 1)
        d_an = jnp.sqrt(an2_acc[...])                                 # (TM, 1), may be +inf
        losses = jnp.maximum(d_ap - d_an + margin, 0.0) * vi_ref[...]
        block_sum = jnp.sum(losses)
        out_ref[...] = jnp.broadcast_to(block_sum, out_ref.shape).astype(jnp.float32)


def hard_triplet_loss(inputs, targets, margin=5.0, *, block_rows=128,
                      block_cols=128, use_bf16_gram=False):
    """inputs: (N, F) float, targets: (N,) int — returns scalar f32 loss."""
    x = jnp.asarray(inputs, jnp.float32)
    t = jnp.asarray(targets, jnp.int32)
    n, f = x.shape

    tm, tn = block_rows, block_cols
    n_pad = _round_up(_round_up(n, tm), tn)
    f_pad = _round_up(f, 128)
    assert n_pad % tm == 0 and n_pad % tn == 0
    gm, gn = n_pad // tm, n_pad // tn

    # Wrapper-side padding + layout plumbing (row and column views; no in-kernel transposes).
    x_p = jnp.zeros((n_pad, f_pad), jnp.float32).at[:n, :f].set(x)
    t_p = jnp.full((n_pad,), -1, jnp.int32).at[:n].set(t)
    v_p = jnp.zeros((n_pad,), jnp.float32).at[:n].set(1.0)
    sqn = jnp.sum(x_p * x_p, axis=1)                                  # (n_pad,)

    kernel = functools.partial(
        hard_triplet_kernel,
        margin=float(margin),
        gram_dtype=jnp.bfloat16 if use_bf16_gram else jnp.float32)

    out = pl.pallas_call(
        kernel,
        out_shape=jax.ShapeDtypeStruct((gm, 128), jnp.float32),
        grid_spec=pltpu.PrefetchScalarGridSpec(
            num_scalar_prefetch=0,
            grid=(gm, gn),
            in_specs=[
                pl.BlockSpec((tm, f_pad), lambda i, j: (i, 0)),   # anchor rows
                pl.BlockSpec((tn, f_pad), lambda i, j: (j, 0)),   # candidate rows
                pl.BlockSpec((tm, 1),     lambda i, j: (i, 0)),   # ||x_i||^2 column
                pl.BlockSpec((1, tn),     lambda i, j: (0, j)),   # ||x_j||^2 row
                pl.BlockSpec((tm, 1),     lambda i, j: (i, 0)),   # labels column
                pl.BlockSpec((1, tn),     lambda i, j: (0, j)),   # labels row
                pl.BlockSpec((tm, 1),     lambda i, j: (i, 0)),   # validity column
                pl.BlockSpec((1, tn),     lambda i, j: (0, j)),   # validity row
            ],
            out_specs=pl.BlockSpec((1, 128), lambda i, j: (i, 0)),
            scratch_shapes=[pltpu.VMEM((tm, 1), jnp.float32),     # hardest-pos dist^2
                            pltpu.VMEM((tm, 1), jnp.float32)],    # hardest-neg dist^2
        ),
        compiler_params=pltpu.CompilerParams(
            dimension_semantics=("parallel", "arbitrary"),
            vmem_limit_bytes=32 * 1024 * 1024,
        ),
    )(x_p, x_p,
      sqn.reshape(n_pad, 1), sqn.reshape(1, n_pad),
      t_p.reshape(n_pad, 1), t_p.reshape(1, n_pad),
      v_p.reshape(n_pad, 1), v_p.reshape(1, n_pad))

    # Lane 0 of each row-block slab holds that block's partial sum; mean over real rows.
    return jnp.sum(out[:, 0]) / jnp.float32(n)


def _reference(inputs, targets, margin=5.0):
    # Pure-JAX reference, same math as the PyTorch module (metric='L2').
    x = inputs.astype(jnp.float32)
    sq = jnp.sum(x * x, axis=-1, keepdims=True)
    dist = jnp.sqrt(jnp.maximum(sq + sq.T - 2.0 * (x @ x.T), 0.0))
    mask = targets[:, None] == targets[None, :]
    d_ap = jnp.max(jnp.where(mask, dist, -jnp.inf), axis=1)
    d_an = jnp.min(jnp.where(mask, jnp.inf, dist), axis=1)
    return jnp.mean(jnp.maximum(d_ap - d_an + margin, 0.0))


if __name__ == "__main__":
    key = jax.random.PRNGKey(0)
    k1, k2 = jax.random.split(key)

    # Case 1: small batch (single 128x128 tile after padding).
    N, F = 8, 32
    inputs = jax.random.normal(k1, (N, F), dtype=jnp.float32)
    targets = jnp.array([0, 0, 1, 1, 2, 2, 3, 3], dtype=jnp.int32)
    loss = hard_triplet_loss(inputs, targets, margin=5.0)
    jax.block_until_ready(loss)
    ref = _reference(inputs, targets, margin=5.0)
    assert jnp.allclose(loss, ref, rtol=1e-4, atol=1e-4), (loss, ref)

    # Case 2: multi-tile (2x2 grid of 128-blocks) with padding (N not a multiple of 128).
    N2, F2 = 200, 64
    inputs2 = jax.random.normal(k2, (N2, F2), dtype=jnp.float32)
    targets2 = (jnp.arange(N2) % 7).astype(jnp.int32)
    loss2 = hard_triplet_loss(inputs2, targets2, margin=5.0)
    jax.block_until_ready(loss2)
    ref2 = _reference(inputs2, targets2, margin=5.0)
    assert jnp.allclose(loss2, ref2, rtol=1e-4, atol=1e-4), (loss2, ref2)

    print("KERNEL_OK")
</pallas_src>

<mosaic_0001>
module attributes {stable_mosaic.version = 11 : i64} {
  func.func @hard_triplet_kernel(%arg0: i32, %arg1: i32, %arg2: memref<128x128xf32, #tpu.memory_space<vmem>>, %arg3: memref<128x128xf32, #tpu.memory_space<vmem>>, %arg4: memref<128x1xf32, #tpu.memory_space<vmem>>, %arg5: memref<1x128xf32, #tpu.memory_space<vmem>>, %arg6: memref<128x1xi32, #tpu.memory_space<vmem>>, %arg7: memref<1x128xi32, #tpu.memory_space<vmem>>, %arg8: memref<128x1xf32, #tpu.memory_space<vmem>>, %arg9: memref<1x128xf32, #tpu.memory_space<vmem>>, %arg10: memref<1x128xf32, #tpu.memory_space<vmem>>, %arg11: memref<128x1xf32, #tpu.memory_space<vmem>>, %arg12: memref<128x1xf32, #tpu.memory_space<vmem>>) attributes {dimension_semantics = [#tpu.dimension_semantics<parallel>, #tpu.dimension_semantics<arbitrary>], iteration_bounds = array<i64: 1, 1>, scalar_prefetch = 0 : i64, scratch_operands = 2 : i64, tpu.core_type = #tpu.core_type<tc>, window_params = [{transform_indices = @transform_0, window_bounds = array<i64: 128, 128>}, {transform_indices = @transform_1, window_bounds = array<i64: 128, 128>}, {transform_indices = @transform_2, window_bounds = array<i64: 128, 1>}, {transform_indices = @transform_3, window_bounds = array<i64: 1, 128>}, {transform_indices = @transform_4, window_bounds = array<i64: 128, 1>}, {transform_indices = @transform_5, window_bounds = array<i64: 1, 128>}, {transform_indices = @transform_6, window_bounds = array<i64: 128, 1>}, {transform_indices = @transform_7, window_bounds = array<i64: 1, 128>}, {transform_indices = @transform_8, window_bounds = array<i64: 1, 128>}]} {
    %c0_i32 = arith.constant 0 : i32
    %0 = arith.cmpi eq, %arg1, %c0_i32 : i32
    %1 = arith.extui %0 : i1 to i32
    %c0_i32_0 = arith.constant 0 : i32
    %2 = arith.cmpi ne, %1, %c0_i32_0 : i32
    scf.if %2 {
      %cst_32 = arith.constant 0xFF800000 : f32
      %46 = vector.broadcast %cst_32 : f32 to vector<128x1xf32>
      %c0_33 = arith.constant 0 : index
      %c0_34 = arith.constant 0 : index
      %47 = vector.load %arg11[%c0_33, %c0_34] : memref<128x1xf32, #tpu.memory_space<vmem>>, vector<128x1xf32>
      tpu.vector_store %arg11[%c0_33, %c0_34], %46 {strides = array<i32>} : memref<128x1xf32, #tpu.memory_space<vmem>>, vector<128x1xf32>,
      %cst_35 = arith.constant 0x7F800000 : f32
      %48 = vector.broadcast %cst_35 : f32 to vector<128x1xf32>
      %c0_36 = arith.constant 0 : index
      %c0_37 = arith.constant 0 : index
      %49 = vector.load %arg12[%c0_36, %c0_37] : memref<128x1xf32, #tpu.memory_space<vmem>>, vector<128x1xf32>
      tpu.vector_store %arg12[%c0_36, %c0_37], %48 {strides = array<i32>} : memref<128x1xf32, #tpu.memory_space<vmem>>, vector<128x1xf32>,
    } else {
    }
    %c0 = arith.constant 0 : index
    %c0_1 = arith.constant 0 : index
    %3 = vector.load %arg2[%c0, %c0_1] : memref<128x128xf32, #tpu.memory_space<vmem>>, vector<128x128xf32>
    %c0_2 = arith.constant 0 : index
    %c0_3 = arith.constant 0 : index
    %4 = vector.load %arg3[%c0_2, %c0_3] : memref<128x128xf32, #tpu.memory_space<vmem>>, vector<128x128xf32>
    %cst = arith.constant dense<0.000000e+00> : vector<128x128xf32>
    %5 = tpu.matmul %3, %4, %cst {dimension_numbers = #tpu.dot_dimension_numbers<[1], [1], [0], [0], [0, 0, 1, 0], [], []>} : vector<128x128xf32>, vector<128x128xf32>, vector<128x128xf32> -> vector<128x128xf32>
    %c0_4 = arith.constant 0 : index
    %c0_5 = arith.constant 0 : index
    %6 = vector.load %arg4[%c0_4, %c0_5] : memref<128x1xf32, #tpu.memory_space<vmem>>, vector<128x1xf32>
    %c0_6 = arith.constant 0 : index
    %c0_7 = arith.constant 0 : index
    %7 = vector.load %arg5[%c0_6, %c0_7] : memref<1x128xf32, #tpu.memory_space<vmem>>, vector<1x128xf32>
    %8 = vector.broadcast %6 : vector<128x1xf32> to vector<128x128xf32>
    %9 = vector.broadcast %7 : vector<1x128xf32> to vector<128x128xf32>
    %10 = arith.addf %8, %9 : vector<128x128xf32>
    %cst_8 = arith.constant 2.000000e+00 : f32
    %11 = vector.broadcast %cst_8 : f32 to vector<128x128xf32>
    %12 = arith.mulf %11, %5 : vector<128x128xf32>
    %13 = arith.subf %10, %12 : vector<128x128xf32>
    %cst_9 = arith.constant 0.000000e+00 : f32
    %14 = vector.broadcast %cst_9 : f32 to vector<128x128xf32>
    %15 = arith.maximumf %13, %14 : vector<128x128xf32>
    %c0_10 = arith.constant 0 : index
    %c0_11 = arith.constant 0 : index
    %16 = vector.load %arg6[%c0_10, %c0_11] : memref<128x1xi32, #tpu.memory_space<vmem>>, vector<128x1xi32>
    %c0_12 = arith.constant 0 : index
    %c0_13 = arith.constant 0 : index
    %17 = vector.load %arg7[%c0_12, %c0_13] : memref<1x128xi32, #tpu.memory_space<vmem>>, vector<1x128xi32>
    %18 = vector.broadcast %16 : vector<128x1xi32> to vector<128x128xi32>
    %19 = vector.broadcast %17 : vector<1x128xi32> to vector<128x128xi32>
    %20 = arith.cmpi eq, %18, %19 : vector<128x128xi32>
    %c0_14 = arith.constant 0 : index
    %c0_15 = arith.constant 0 : index
    %21 = vector.load %arg9[%c0_14, %c0_15] : memref<1x128xf32, #tpu.memory_space<vmem>>, vector<1x128xf32>
    %cst_16 = arith.constant 5.000000e-01 : f32
    %22 = vector.broadcast %cst_16 : f32 to vector<1x128xf32>
    %23 = arith.cmpf ogt, %21, %22 : vector<1x128xf32>
    %24 = vector.broadcast %23 : vector<1x128xi1> to vector<128x128xi1>
    %25 = arith.andi %20, %24 : vector<128x128xi1>
    %cst_17 = arith.constant dense<true> : vector<128x128xi1>
    %26 = arith.xori %20, %cst_17 : vector<128x128xi1>
    %27 = vector.broadcast %23 : vector<1x128xi1> to vector<128x128xi1>
    %28 = arith.andi %26, %27 : vector<128x128xi1>
    %c0_18 = arith.constant 0 : index
    %c0_19 = arith.constant 0 : index
    %29 = vector.load %arg11[%c0_18, %c0_19] : memref<128x1xf32, #tpu.memory_space<vmem>>, vector<128x1xf32>
    %cst_20 = arith.constant 0xFF800000 : f32
    %30 = vector.broadcast %cst_20 : f32 to vector<128x128xf32>
    %31 = arith.select %25, %15, %30 : vector<128x128xi1>, vector<128x128xf32>
    %cst_21 = arith.constant dense<0xFF800000> : vector<128xf32>
    %32 = vector.multi_reduction <maximumf>, %31, %cst_21 [1] : vector<128x128xf32> to vector<128xf32>
    %33 = vector.shape_cast %32 : vector<128xf32> to vector<128x1xf32>
    %34 = arith.maximumf %29, %33 : vector<128x1xf32>
    %c0_22 = arith.constant 0 : index
    %c0_23 = arith.constant 0 : index
    %35 = vector.load %arg11[%c0_22, %c0_23] : memref<128x1xf32, #tpu.memory_space<vmem>>, vector<128x1xf32>
    tpu.vector_store %arg11[%c0_22, %c0_23], %34 {strides = array<i32>} : memref<128x1xf32, #tpu.memory_space<vmem>>, vector<128x1xf32>,
    %c0_24 = arith.constant 0 : index
    %c0_25 = arith.constant 0 : index
    %36 = vector.load %arg12[%c0_24, %c0_25] : memref<128x1xf32, #tpu.memory_space<vmem>>, vector<128x1xf32>
    %cst_26 = arith.constant 0x7F800000 : f32
    %37 = vector.broadcast %cst_26 : f32 to vector<128x128xf32>
    %38 = arith.select %28, %15, %37 : vector<128x128xi1>, vector<128x128xf32>
    %cst_27 = arith.constant dense<0x7F800000> : vector<128xf32>
    %39 = vector.multi_reduction <minimumf>, %38, %cst_27 [1] : vector<128x128xf32> to vector<128xf32>
    %40 = vector.shape_cast %39 : vector<128xf32> to vector<128x1xf32>
    %41 = arith.minimumf %36, %40 : vector<128x1xf32>
    %c0_28 = arith.constant 0 : index
    %c0_29 = arith.constant 0 : index
    %42 = vector.load %arg12[%c0_28, %c0_29] : memref<128x1xf32, #tpu.memory_space<vmem>>, vector<128x1xf32>
    tpu.vector_store %arg12[%c0_28, %c0_29], %41 {strides = array<i32>} : memref<128x1xf32, #tpu.memory_space<vmem>>, vector<128x1xf32>,
    %c0_i32_30 = arith.constant 0 : i32
    %43 = arith.cmpi eq, %arg1, %c0_i32_30 : i32
    %44 = arith.extui %43 : i1 to i32
    %c0_i32_31 = arith.constant 0 : i32
    %45 = arith.cmpi ne, %44, %c0_i32_31 : i32
    scf.if %45 {
      %c0_32 = arith.constant 0 : index
      %c0_33 = arith.constant 0 : index
      %46 = vector.load %arg11[%c0_32, %c0_33] : memref<128x1xf32, #tpu.memory_space<vmem>>, vector<128x1xf32>
      %cst_34 = arith.constant 0.000000e+00 : f32
      %47 = vector.broadcast %cst_34 : f32 to vector<128x1xf32>
      %48 = arith.maximumf %46, %47 : vector<128x1xf32>
      %49 = math.sqrt %48 : vector<128x1xf32>
      %c0_35 = arith.constant 0 : index
      %c0_36 = arith.constant 0 : index
      %50 = vector.load %arg12[%c0_35, %c0_36] : memref<128x1xf32, #tpu.memory_space<vmem>>, vector<128x1xf32>
      %51 = math.sqrt %50 : vector<128x1xf32>
      %52 = arith.subf %49, %51 : vector<128x1xf32>
      %cst_37 = arith.constant 5.000000e+00 : f32
      %53 = vector.broadcast %cst_37 : f32 to vector<128x1xf32>
      %54 = arith.addf %52, %53 : vector<128x1xf32>
      %cst_38 = arith.constant 0.000000e+00 : f32
      %55 = vector.broadcast %cst_38 : f32 to vector<128x1xf32>
      %56 = arith.maximumf %54, %55 : vector<128x1xf32>
      %c0_39 = arith.constant 0 : index
      %c0_40 = arith.constant 0 : index
      %57 = vector.load %arg8[%c0_39, %c0_40] : memref<128x1xf32, #tpu.memory_space<vmem>>, vector<128x1xf32>
      %58 = arith.mulf %56, %57 : vector<128x1xf32>
      %59 = vector.shape_cast %58 : vector<128x1xf32> to vector<1x128x1xf32>
      %cst_41 = arith.constant dense<0.000000e+00> : vector<1xf32>
      %60 = vector.multi_reduction <add>, %59, %cst_41 [1, 2] : vector<1x128x1xf32> to vector<1xf32>
      %61 = vector.shape_cast %60 : vector<1xf32> to vector<1x1x1xf32>
      %62 = vector.extract %61[0, 0, 0] : f32 from vector<1x1x1xf32>
      %63 = vector.broadcast %62 : f32 to vector<1x128xf32>
      %c0_42 = arith.constant 0 : index
      %c0_43 = arith.constant 0 : index
      %64 = vector.load %arg10[%c0_42, %c0_43] : memref<1x128xf32, #tpu.memory_space<vmem>>, vector<1x128xf32>
      tpu.vector_store %arg10[%c0_42, %c0_43], %63 {strides = array<i32>} : memref<1x128xf32, #tpu.memory_space<vmem>>, vector<1x128xf32>,
    } else {
    }
    return
  }
  func.func @transform_0(%arg0: i32, %arg1: i32) -> (i32, i32) {
    %c0_i32 = arith.constant 0 : i32
    %c0_i32_0 = arith.constant 0 : i32
    return %arg0, %c0_i32 : i32, i32
  }
  func.func @transform_1(%arg0: i32, %arg1: i32) -> (i32, i32) {
    %c0_i32 = arith.constant 0 : i32
    %c0_i32_0 = arith.constant 0 : i32
    return %arg1, %c0_i32 : i32, i32
  }
  func.func @transform_2(%arg0: i32, %arg1: i32) -> (i32, i32) {
    %c0_i32 = arith.constant 0 : i32
    %c0_i32_0 = arith.constant 0 : i32
    return %arg0, %c0_i32 : i32, i32
  }
  func.func @transform_3(%arg0: i32, %arg1: i32) -> (i32, i32) {
    %c0_i32 = arith.constant 0 : i32
    %c0_i32_0 = arith.constant 0 : i32
    return %c0_i32, %arg1 : i32, i32
  }
  func.func @transform_4(%arg0: i32, %arg1: i32) -> (i32, i32) {
    %c0_i32 = arith.constant 0 : i32
    %c0_i32_0 = arith.constant 0 : i32
    return %arg0, %c0_i32 : i32, i32
  }
  func.func @transform_5(%arg0: i32, %arg1: i32) -> (i32, i32) {
    %c0_i32 = arith.constant 0 : i32
    %c0_i32_0 = arith.constant 0 : i32
    return %c0_i32, %arg1 : i32, i32
  }
  func.func @transform_6(%arg0: i32, %arg1: i32) -> (i32, i32) {
    %c0_i32 = arith.constant 0 : i32
    %c0_i32_0 = arith.constant 0 : i32
    return %arg0, %c0_i32 : i32, i32
  }
  func.func @transform_7(%arg0: i32, %arg1: i32) -> (i32, i32) {
    %c0_i32 = arith.constant 0 : i32
    %c0_i32_0 = arith.constant 0 : i32
    return %c0_i32, %arg1 : i32, i32
  }
  func.func @transform_8(%arg0: i32, %arg1: i32) -> (i32, i32) {
    %c0_i32 = arith.constant 0 : i32
    %c0_i32_0 = arith.constant 0 : i32
    return %arg0, %c0_i32 : i32, i32
  }
}

</mosaic_0001>

<llo_original>
// kernel: tpu_custom_call.1
$region0: #{tpu_custom_call.1}
  #allocation0 [shape = 'u32[]', space=smem, size = 0x4, offset = 0x4, fixed_abs, tag = 'smem constant byte address 0x4 - core index']
  #allocation1 [shape = 'u32[72,128]{1,0:T(1,128)}', space=vmem, size = 0x9000, scoped, tag = 'internal scratch']
  #allocation2 [shape = 'f32[128,1]{1,0:T(8,128)}', space=vmem, size = 0x10000, scoped, tag = 'scratch operand']
  #allocation3 [shape = 'f32[128,1]{1,0:T(8,128)}', space=vmem, size = 0x10000, scoped, tag = 'scratch operand']
  %s0 = inlined_call_operand.vmem [shape: f32[128,128], index: 0, kind: input, shape index: {}]
  %s1 = inlined_call_operand.vmem [shape: f32[128,128], index: 1, kind: input, shape index: {}]
  %s2 = inlined_call_operand.vmem [shape: f32[128,1], index: 2, kind: input, shape index: {}]
  %s3 = inlined_call_operand.vmem [shape: f32[1,128], index: 3, kind: input, shape index: {}]
  %s4 = inlined_call_operand.vmem [shape: s32[128,1], index: 4, kind: input, shape index: {}]
  %s5 = inlined_call_operand.vmem [shape: s32[1,128], index: 5, kind: input, shape index: {}]
  %s6 = inlined_call_operand.vmem [shape: f32[128,1], index: 6, kind: input, shape index: {}]
  %s7 = inlined_call_operand.vmem [shape: f32[1,128], index: 7, kind: input, shape index: {}]
  %s8 = inlined_call_operand.hbm [shape: f32[1,128], index: 8, kind: output, shape index: {}]
  %s9 = sld [smem:[#allocation0]]
  $region50: #{tpu_custom_call.1} parent=0
    _
  %s11 = ssub.s32 1, %s9
  %s12 = scalar_select 0, %s11, %s9
  $region1: #{tpu_custom_call.1} parent=0
    #allocation4 [shape = 'u8[512]{0}', space=vmem, size = 0x400, scoped, tag = 'output window, operand 0, single buffered']
    #allocation5 [shape = 's32[1]{0}', space=sflag, size = 0x4, scoped, tag = 'scoped memory for tpu_custom_call.1']
    %13 = vsyncpa [#allocation5], 0
    // Predicated region
    $region2: #{tpu_custom_call.1} parent=1 // pred_check
      _
    $region3: #{tpu_custom_call.1} parent=1 // pred_check_branch
      %15 = sbr.rel (0) target = $region5
    $region4: #{tpu_custom_call.1} parent=1 // pred_region
      _
    $region5: #{tpu_custom_call.1} parent=1 // pred_fallthru
      _
    // Predicated region
    $region6: #{tpu_custom_call.1} parent=1 // pred_check
      _
    $region7: #{tpu_custom_call.1} parent=1 // pred_check_branch
      %17 = sbr.rel (0) target = $region9
    $region8: #{tpu_custom_call.1} parent=1 // pred_region
      _
    $region9: #{tpu_custom_call.1} parent=1 // pred_fallthru
      _
    // Predicated region
    $region10: #{tpu_custom_call.1} parent=1 // pred_check
      _
    $region11: #{tpu_custom_call.1} parent=1 // pred_check_branch
      %19 = sbr.rel (0) target = $region13
    $region12: #{tpu_custom_call.1} parent=1 // pred_region
      _
    $region13: #{tpu_custom_call.1} parent=1 // pred_fallthru
      _
    // Predicated region
    $region14: #{tpu_custom_call.1} parent=1 // pred_check
      _
    $region15: #{tpu_custom_call.1} parent=1 // pred_check_branch
      %21 = sbr.rel (0) target = $region17
    $region16: #{tpu_custom_call.1} parent=1 // pred_region
      _
    $region17: #{tpu_custom_call.1} parent=1 // pred_fallthru
      _
    // Predicated region
    $region18: #{tpu_custom_call.1} parent=1 // pred_check
      _
    $region19: #{tpu_custom_call.1} parent=1 // pred_check_branch
      %23 = sbr.rel (0) target = $region21
    $region20: #{tpu_custom_call.1} parent=1 // pred_region
      _
    $region21: #{tpu_custom_call.1} parent=1 // pred_fallthru
      _
    // Predicated region
    $region22: #{tpu_custom_call.1} parent=1 // pred_check
      _
    $region23: #{tpu_custom_call.1} parent=1 // pred_check_branch
      %25 = sbr.rel (0) target = $region25
    $region24: #{tpu_custom_call.1} parent=1 // pred_region
      _
    $region25: #{tpu_custom_call.1} parent=1 // pred_fallthru
      _
    // Predicated region
    $region26: #{tpu_custom_call.1} parent=1 // pred_check
      _
    $region27: #{tpu_custom_call.1} parent=1 // pred_check_branch
      %27 = sbr.rel (0) target = $region29
    $region28: #{tpu_custom_call.1} parent=1 // pred_region
      _
    $region29: #{tpu_custom_call.1} parent=1 // pred_fallthru
      _
    // Predicated region
    $region30: #{tpu_custom_call.1} parent=1 // pred_check
      _
    $region31: #{tpu_custom_call.1} parent=1 // pred_check_branch
      %29 = sbr.rel (0) target = $region33
    $region32: #{tpu_custom_call.1} parent=1 // pred_region
      _
    $region33: #{tpu_custom_call.1} parent=1 // pred_fallthru
      _
    %p30 = scmp.eq.s32.totalorder 0, 0
    // Predicated region
    $region34: #{tpu_custom_call.1} parent=1 // pred_check
      %p31 = pneg %p30
    $region35: #{tpu_custom_call.1} parent=1 // pred_check_branch
      %33 = sbr.rel (%p31) target = $region37
    $region36: #{tpu_custom_call.1} parent=1 // pred_region
      %vm34 = vcmask 7168
      %35 = vst.msk [vmem:[#allocation2] sm:$0xff] %vm34, -inf
      %36 = vst.msk [vmem:[#allocation2 + $0x8] sm:$0xff] %vm34, -inf
      %37 = vst.msk [vmem:[#allocation2 + $0x10] sm:$0xff] %vm34, -inf
      %38 = vst.msk [vmem:[#allocation2 + $0x18] sm:$0xff] %vm34, -inf
      %39 = vst.msk [vmem:[#allocation2 + $0x20] sm:$0xff] %vm34, -inf
      %40 = vst.msk [vmem:[#allocation2 + $0x28] sm:$0xff] %vm34, -inf
      %41 = vst.msk [vmem:[#allocation2 + $0x30] sm:$0xff] %vm34, -inf
      %42 = vst.msk [vmem:[#allocation2 + $0x38] sm:$0xff] %vm34, -inf
      %43 = vst.msk [vmem:[#allocation2 + $0x40] sm:$0xff] %vm34, -inf
      %44 = vst.msk [vmem:[#allocation2 + $0x48] sm:$0xff] %vm34, -inf
      %45 = vst.msk [vmem:[#allocation2 + $0x50] sm:$0xff] %vm34, -inf
      %46 = vst.msk [vmem:[#allocation2 + $0x58] sm:$0xff] %vm34, -inf
      %47 = vst.msk [vmem:[#allocation2 + $0x60] sm:$0xff] %vm34, -inf
      %48 = vst.msk [vmem:[#allocation2 + $0x68] sm:$0xff] %vm34, -inf
      %49 = vst.msk [vmem:[#allocation2 + $0x70] sm:$0xff] %vm34, -inf
      %50 = vst.msk [vmem:[#allocation2 + $0x78] sm:$0xff] %vm34, -inf
      %51 = vst.msk [vmem:[#allocation3] sm:$0xff] %vm34, inf
      %52 = vst.msk [vmem:[#allocation3 + $0x8] sm:$0xff] %vm34, inf
      %53 = vst.msk [vmem:[#allocation3 + $0x10] sm:$0xff] %vm34, inf
      %54 = vst.msk [vmem:[#allocation3 + $0x18] sm:$0xff] %vm34, inf
      %55 = vst.msk [vmem:[#allocation3 + $0x20] sm:$0xff] %vm34, inf
      %56 = vst.msk [vmem:[#allocation3 + $0x28] sm:$0xff] %vm34, inf
      %57 = vst.msk [vmem:[#allocation3 + $0x30] sm:$0xff] %vm34, inf
      %58 = vst.msk [vmem:[#allocation3 + $0x38] sm:$0xff] %vm34, inf
      %59 = vst.msk [vmem:[#allocation3 + $0x40] sm:$0xff] %vm34, inf
      %60 = vst.msk [vmem:[#allocation3 + $0x48] sm:$0xff] %vm34, inf
      %61 = vst.msk [vmem:[#allocation3 + $0x50] sm:$0xff] %vm34, inf
      %62 = vst.msk [vmem:[#allocation3 + $0x58] sm:$0xff] %vm34, inf
      %63 = vst.msk [vmem:[#allocation3 + $0x60] sm:$0xff] %vm34, inf
      %64 = vst.msk [vmem:[#allocation3 + $0x68] sm:$0xff] %vm34, inf
      %65 = vst.msk [vmem:[#allocation3 + $0x70] sm:$0xff] %vm34, inf
      %66 = vst.msk [vmem:[#allocation3 + $0x78] sm:$0xff] %vm34, inf
    $region37: #{tpu_custom_call.1} parent=1 // pred_fallthru
      _
    %v67 = vld [vmem:[%s0] sm:$0xff]
    %v68 = vld [vmem:[%s0 + $0x8] sm:$0xff]
    %v69 = vld [vmem:[%s0 + $0x10] sm:$0xff]
    %v70 = vld [vmem:[%s0 + $0x18] sm:$0xff]
    %v71 = vld [vmem:[%s0 + $0x20] sm:$0xff]
    %v72 = vld [vmem:[%s0 + $0x28] sm:$0xff]
    %v73 = vld [vmem:[%s0 + $0x30] sm:$0xff]
    %v74 = vld [vmem:[%s0 + $0x38] sm:$0xff]
    %v75 = vld [vmem:[%s0 + $0x40] sm:$0xff]
    %v76 = vld [vmem:[%s0 + $0x48] sm:$0xff]
    %v77 = vld [vmem:[%s0 + $0x50] sm:$0xff]
    %v78 = vld [vmem:[%s0 + $0x58] sm:$0xff]
    %v79 = vld [vmem:[%s0 + $0x60] sm:$0xff]
    %v80 = vld [vmem:[%s0 + $0x68] sm:$0xff]
    %v81 = vld [vmem:[%s0 + $0x70] sm:$0xff]
    %v82 = vld [vmem:[%s0 + $0x78] sm:$0xff]
    %v83 = vld [vmem:[%s1] sm:$0xff]
    %v84 = vld [vmem:[%s1 + $0x8] sm:$0xff]
    %v85 = vld [vmem:[%s1 + $0x10] sm:$0xff]
    %v86 = vld [vmem:[%s1 + $0x18] sm:$0xff]
    %v87 = vld [vmem:[%s1 + $0x20] sm:$0xff]
    %v88 = vld [vmem:[%s1 + $0x28] sm:$0xff]
    %v89 = vld [vmem:[%s1 + $0x30] sm:$0xff]
    %v90 = vld [vmem:[%s1 + $0x38] sm:$0xff]
    %v91 = vld [vmem:[%s1 + $0x40] sm:$0xff]
    %v92 = vld [vmem:[%s1 + $0x48] sm:$0xff]
    %v93 = vld [vmem:[%s1 + $0x50] sm:$0xff]
    %v94 = vld [vmem:[%s1 + $0x58] sm:$0xff]
    %v95 = vld [vmem:[%s1 + $0x60] sm:$0xff]
    %v96 = vld [vmem:[%s1 + $0x68] sm:$0xff]
    %v97 = vld [vmem:[%s1 + $0x70] sm:$0xff]
    %v98 = vld [vmem:[%s1 + $0x78] sm:$0xff]
    %99 = vmatpush.xpose.msra.mxu0 %v98
    %100 = vmatpush.xpose.msra.mxu0 %v97
    %101 = vmatpush.xpose.msra.mxu0 %v96
    %102 = vmatpush.xpose.msra.mxu0 %v95
    %103 = vmatpush.xpose.msra.mxu0 %v94
    %104 = vmatpush.xpose.msra.mxu0 %v93
    %105 = vmatpush.xpose.msra.mxu0 %v92
    %106 = vmatpush.xpose.msra.mxu0 %v91
    %107 = vmatpush.xpose.msra.mxu0 %v90
    %108 = vmatpush.xpose.msra.mxu0 %v89
    %109 = vmatpush.xpose.msra.mxu0 %v88
    %110 = vmatpush.xpose.msra.mxu0 %v87
    %111 = vmatpush.xpose.msra.mxu0 %v86
    %112 = vmatpush.xpose.msra.mxu0 %v85
    %113 = vmatpush.xpose.msra.mxu0 %v84
    %114 = vmatpush.xpose.msra.mxu0 %v83
    %115 = vmatmul.f32.gmra.mxu0 %v67
    %v116 = vpop.f32.mrf.mxu0
    %v117 = vadd.f32 0.0, %v116
    %118 = vmatmul.f32.gmra.mxu0 %v68
    %v119 = vpop.f32.mrf.mxu0
    %v120 = vadd.f32 0.0, %v119
    %121 = vmatmul.f32.gmra.mxu0 %v69
    %v122 = vpop.f32.mrf.mxu0
    %v123 = vadd.f32 0.0, %v122
    %124 = vmatmul.f32.gmra.mxu0 %v70
    %v125 = vpop.f32.mrf.mxu0
    %v126 = vadd.f32 0.0, %v125
    %127 = vmatmul.f32.gmra.mxu0 %v71
    %v128 = vpop.f32.mrf.mxu0
    %v129 = vadd.f32 0.0, %v128
    %130 = vmatmul.f32.gmra.mxu0 %v72
    %v131 = vpop.f32.mrf.mxu0
    %v132 = vadd.f32 0.0, %v131
    %133 = vmatmul.f32.gmra.mxu0 %v73
    %v134 = vpop.f32.mrf.mxu0
    %v135 = vadd.f32 0.0, %v134
    %136 = vmatmul.f32.gmra.mxu0 %v74
    %v137 = vpop.f32.mrf.mxu0
    %v138 = vadd.f32 0.0, %v137
    %139 = vmatmul.f32.gmra.mxu0 %v75
    %v140 = vpop.f32.mrf.mxu0
    %v141 = vadd.f32 0.0, %v140
    %142 = vmatmul.f32.gmra.mxu0 %v76
    %v143 = vpop.f32.mrf.mxu0
    %v144 = vadd.f32 0.0, %v143
    %145 = vmatmul.f32.gmra.mxu0 %v77
    %v146 = vpop.f32.mrf.mxu0
    %v147 = vadd.f32 0.0, %v146
    %148 = vmatmul.f32.gmra.mxu0 %v78
    %v149 = vpop.f32.mrf.mxu0
    %v150 = vadd.f32 0.0, %v149
    %151 = vmatmul.f32.gmra.mxu0 %v79
    %v152 = vpop.f32.mrf.mxu0
    %v153 = vadd.f32 0.0, %v152
    %154 = vmatmul.f32.gmra.mxu0 %v80
    %v155 = vpop.f32.mrf.mxu0
    %v156 = vadd.f32 0.0, %v155
    %157 = vmatmul.f32.gmra.mxu0 %v81
    %v158 = vpop.f32.mrf.mxu0
    %v159 = vadd.f32 0.0, %v158
    %160 = vmatmul.f32.gmra.mxu0 %v82
    %v161 = vpop.f32.mrf.mxu0
    %v162 = vadd.f32 0.0, %v161
    %163 = vdwg.mxu0
    %v164 = vld [vmem:[%s2] sm:$0xff]
    %v165 = vld [vmem:[%s2 + $0x8] sm:$0xff]
    %v166 = vld [vmem:[%s2 + $0x10] sm:$0xff]
    %v167 = vld [vmem:[%s2 + $0x18] sm:$0xff]
    %v168 = vld [vmem:[%s2 + $0x20] sm:$0xff]
    %v169 = vld [vmem:[%s2 + $0x28] sm:$0xff]
    %v170 = vld [vmem:[%s2 + $0x30] sm:$0xff]
    %v171 = vld [vmem:[%s2 + $0x38] sm:$0xff]
    %v172 = vld [vmem:[%s2 + $0x40] sm:$0xff]
    %v173 = vld [vmem:[%s2 + $0x48] sm:$0xff]
    %v174 = vld [vmem:[%s2 + $0x50] sm:$0xff]
    %v175 = vld [vmem:[%s2 + $0x58] sm:$0xff]
    %v176 = vld [vmem:[%s2 + $0x60] sm:$0xff]
    %v177 = vld [vmem:[%s2 + $0x68] sm:$0xff]
    %v178 = vld [vmem:[%s2 + $0x70] sm:$0xff]
    %v179 = vld [vmem:[%s2 + $0x78] sm:$0xff]
    %v180 = vld [vmem:[%s3] sm:$0x1]
    %182 = vset.pattern.permute.xlu0 0
    %183 = vperm.xlu0 %182, %v164
    %v184 = vpop.permute.xlu0 %183
    %187 = vset.pattern.permute.xlu0 0
    %188 = vperm.xlu0 %187, %v165
    %v189 = vpop.permute.xlu0 %188
    %192 = vset.pattern.permute.xlu0 0
    %193 = vperm.xlu0 %192, %v166
    %v194 = vpop.permute.xlu0 %193
    %197 = vset.pattern.permute.xlu0 0
    %198 = vperm.xlu0 %197, %v167
    %v199 = vpop.permute.xlu0 %198
    %202 = vset.pattern.permute.xlu0 0
    %203 = vperm.xlu0 %202, %v168
    %v204 = vpop.permute.xlu0 %203
    %207 = vset.pattern.permute.xlu0 0
    %208 = vperm.xlu0 %207, %v169
    %v209 = vpop.permute.xlu0 %208
    %212 = vset.pattern.permute.xlu0 0
    %213 = vperm.xlu0 %212, %v170
    %v214 = vpop.permute.xlu0 %213
    %217 = vset.pattern.permute.xlu0 0
    %218 = vperm.xlu0 %217, %v171
    %v219 = vpop.permute.xlu0 %218
    %222 = vset.pattern.permute.xlu0 0
    %223 = vperm.xlu0 %222, %v172
    %v224 = vpop.permute.xlu0 %223
    %227 = vset.pattern.permute.xlu0 0
    %228 = vperm.xlu0 %227, %v173
    %v229 = vpop.permute.xlu0 %228
    %232 = vset.pattern.permute.xlu0 0
    %233 = vperm.xlu0 %232, %v174
    %v234 = vpop.permute.xlu0 %233
    %237 = vset.pattern.permute.xlu0 0
    %238 = vperm.xlu0 %237, %v175
    %v239 = vpop.permute.xlu0 %238
    %242 = vset.pattern.permute.xlu0 0
    %243 = vperm.xlu0 %242, %v176
    %v244 = vpop.permute.xlu0 %243
    %247 = vset.pattern.permute.xlu0 0
    %248 = vperm.xlu0 %247, %v177
    %v249 = vpop.permute.xlu0 %248
    %252 = vset.pattern.permute.xlu0 0
    %253 = vperm.xlu0 %252, %v178
    %v254 = vpop.permute.xlu0 %253
    %257 = vset.pattern.permute.xlu0 0
    %258 = vperm.xlu0 %257, %v179
    %v259 = vpop.permute.xlu0 %258
    %v262 = vperm.slane %v180, 0
    %v264 = vadd.f32 %v184, %v262
    %v265 = vadd.f32 %v189, %v262
    %v266 = vadd.f32 %v194, %v262
    %v267 = vadd.f32 %v199, %v262
    %v268 = vadd.f32 %v204, %v262
    %v269 = vadd.f32 %v209, %v262
    %v270 = vadd.f32 %v214, %v262
    %v271 = vadd.f32 %v219, %v262
    %v272 = vadd.f32 %v224, %v262
    %v273 = vadd.f32 %v229, %v262
    %v274 = vadd.f32 %v234, %v262
    %v275 = vadd.f32 %v239, %v262
    %v276 = vadd.f32 %v244, %v262
    %v277 = vadd.f32 %v249, %v262
    %v278 = vadd.f32 %v254, %v262
    %v279 = vadd.f32 %v259, %v262
    %v280 = vmul.f32 %v117, 2.0
    %v281 = vmul.f32 %v120, 2.0
    %v282 = vmul.f32 %v123, 2.0
    %v283 = vmul.f32 %v126, 2.0
    %v284 = vmul.f32 %v129, 2.0
    %v285 = vmul.f32 %v132, 2.0
    %v286 = vmul.f32 %v135, 2.0
    %v287 = vmul.f32 %v138, 2.0
    %v288 = vmul.f32 %v141, 2.0
    %v289 = vmul.f32 %v144, 2.0
    %v290 = vmul.f32 %v147, 2.0
    %v291 = vmul.f32 %v150, 2.0
    %v292 = vmul.f32 %v153, 2.0
    %v293 = vmul.f32 %v156, 2.0
    %v294 = vmul.f32 %v159, 2.0
    %v295 = vmul.f32 %v162, 2.0
    %v296 = vsub.f32 %v264, %v280
    %v297 = vsub.f32 %v265, %v281
    %v298 = vsub.f32 %v266, %v282
    %v299 = vsub.f32 %v267, %v283
    %v300 = vsub.f32 %v268, %v284
    %v301 = vsub.f32 %v269, %v285
    %v302 = vsub.f32 %v270, %v286
    %v303 = vsub.f32 %v271, %v287
    %v304 = vsub.f32 %v272, %v288
    %v305 = vsub.f32 %v273, %v289
    %v306 = vsub.f32 %v274, %v290
    %v307 = vsub.f32 %v275, %v291
    %v308 = vsub.f32 %v276, %v292
    %v309 = vsub.f32 %v277, %v293
    %v310 = vsub.f32 %v278, %v294
    %v311 = vsub.f32 %v279, %v295
    %v312 = vmax.f32 %v296, 0.0
    %v313 = vmax.f32 %v297, 0.0
    %v314 = vmax.f32 %v298, 0.0
    %v315 = vmax.f32 %v299, 0.0
    %v316 = vmax.f32 %v300, 0.0
    %v317 = vmax.f32 %v301, 0.0
    %v318 = vmax.f32 %v302, 0.0
    %v319 = vmax.f32 %v303, 0.0
    %v320 = vmax.f32 %v304, 0.0
    %v321 = vmax.f32 %v305, 0.0
    %v322 = vmax.f32 %v306, 0.0
    %v323 = vmax.f32 %v307, 0.0
    %v324 = vmax.f32 %v308, 0.0
    %v325 = vmax.f32 %v309, 0.0
    %v326 = vmax.f32 %v310, 0.0
    %v327 = vmax.f32 %v311, 0.0
    %v328 = vld [vmem:[%s4] sm:$0xff]
    %v329 = vld [vmem:[%s4 + $0x8] sm:$0xff]
    %v330 = vld [vmem:[%s4 + $0x10] sm:$0xff]
    %v331 = vld [vmem:[%s4 + $0x18] sm:$0xff]
    %v332 = vld [vmem:[%s4 + $0x20] sm:$0xff]
    %v333 = vld [vmem:[%s4 + $0x28] sm:$0xff]
    %v334 = vld [vmem:[%s4 + $0x30] sm:$0xff]
    %v335 = vld [vmem:[%s4 + $0x38] sm:$0xff]
    %v336 = vld [vmem:[%s4 + $0x40] sm:$0xff]
    %v337 = vld [vmem:[%s4 + $0x48] sm:$0xff]
    %v338 = vld [vmem:[%s4 + $0x50] sm:$0xff]
    %v339 = vld [vmem:[%s4 + $0x58] sm:$0xff]
    %v340 = vld [vmem:[%s4 + $0x60] sm:$0xff]
    %v341 = vld [vmem:[%s4 + $0x68] sm:$0xff]
    %v342 = vld [vmem:[%s4 + $0x70] sm:$0xff]
    %v343 = vld [vmem:[%s4 + $0x78] sm:$0xff]
    %v344 = vld [vmem:[%s5] sm:$0x1]
    %345 = vset.pattern.permute.xlu0 0
    %346 = vperm.xlu0 %345, %v328
    %v347 = vpop.permute.xlu0 %346
    %348 = vset.pattern.permute.xlu0 0
    %349 = vperm.xlu0 %348, %v329
    %v350 = vpop.permute.xlu0 %349
    %351 = vset.pattern.permute.xlu0 0
    %352 = vperm.xlu0 %351, %v330
    %v353 = vpop.permute.xlu0 %352
    %354 = vset.pattern.permute.xlu0 0
    %355 = vperm.xlu0 %354, %v331
    %v356 = vpop.permute.xlu0 %355
    %357 = vset.pattern.permute.xlu0 0
    %358 = vperm.xlu0 %357, %v332
    %v359 = vpop.permute.xlu0 %358
    %360 = vset.pattern.permute.xlu0 0
    %361 = vperm.xlu0 %360, %v333
    %v362 = vpop.permute.xlu0 %361
    %363 = vset.pattern.permute.xlu0 0
    %364 = vperm.xlu0 %363, %v334
    %v365 = vpop.permute.xlu0 %364
    %366 = vset.pattern.permute.xlu0 0
    %367 = vperm.xlu0 %366, %v335
    %v368 = vpop.permute.xlu0 %367
    %369 = vset.pattern.permute.xlu0 0
    %370 = vperm.xlu0 %369, %v336
    %v371 = vpop.permute.xlu0 %370
    %372 = vset.pattern.permute.xlu0 0
    %373 = vperm.xlu0 %372, %v337
    %v374 = vpop.permute.xlu0 %373
    %375 = vset.pattern.permute.xlu0 0
    %376 = vperm.xlu0 %375, %v338
    %v377 = vpop.permute.xlu0 %376
    %378 = vset.pattern.permute.xlu0 0
    %379 = vperm.xlu0 %378, %v339
    %v380 = vpop.permute.xlu0 %379
    %381 = vset.pattern.permute.xlu0 0
    %382 = vperm.xlu0 %381, %v340
    %v383 = vpop.permute.xlu0 %382
    %384 = vset.pattern.permute.xlu0 0
    %385 = vperm.xlu0 %384, %v341
    %v386 = vpop.permute.xlu0 %385
    %387 = vset.pattern.permute.xlu0 0
    %388 = vperm.xlu0 %387, %v342
    %v389 = vpop.permute.xlu0 %388
    %390 = vset.pattern.permute.xlu0 0
    %391 = vperm.xlu0 %390, %v343
    %v392 = vpop.permute.xlu0 %391
    %v393 = vperm.slane %v344, 0
    %vm394 = vcmp.eq.s32.totalorder %v347, %v393
    %vm395 = vcmp.eq.s32.totalorder %v350, %v393
    %vm396 = vcmp.eq.s32.totalorder %v353, %v393
    %vm397 = vcmp.eq.s32.totalorder %v356, %v393
    %vm398 = vcmp.eq.s32.totalorder %v359, %v393
    %vm399 = vcmp.eq.s32.totalorder %v362, %v393
    %vm400 = vcmp.eq.s32.totalorder %v365, %v393
    %vm401 = vcmp.eq.s32.totalorder %v368, %v393
    %vm402 = vcmp.eq.s32.totalorder %v371, %v393
    %vm403 = vcmp.eq.s32.totalorder %v374, %v393
    %vm404 = vcmp.eq.s32.totalorder %v377, %v393
    %vm405 = vcmp.eq.s32.totalorder %v380, %v393
    %vm406 = vcmp.eq.s32.totalorder %v383, %v393
    %vm407 = vcmp.eq.s32.totalorder %v386, %v393
    %vm408 = vcmp.eq.s32.totalorder %v389, %v393
    %vm409 = vcmp.eq.s32.totalorder %v392, %v393
    %v410 = vld [vmem:[%s7] sm:$0x1]
    %vm411 = vcmp.gt.f32.partialorder %v410, 0.5
    %v412 = vsel %vm411, 1, 0
    %v413 = vperm.slane %v412, 0
    %vm414 = vcmp.eq.s32.totalorder %v413, 1
    %vm415 = vmand %vm394, %vm414
    %vm416 = vmand %vm395, %vm414
    %vm417 = vmand %vm396, %vm414
    %vm418 = vmand %vm397, %vm414
    %vm419 = vmand %vm398, %vm414
    %vm420 = vmand %vm399, %vm414
    %vm421 = vmand %vm400, %vm414
    %vm422 = vmand %vm401, %vm414
    %vm423 = vmand %vm402, %vm414
    %vm424 = vmand %vm403, %vm414
    %vm425 = vmand %vm404, %vm414
    %vm426 = vmand %vm405, %vm414
    %vm427 = vmand %vm406, %vm414
    %vm428 = vmand %vm407, %vm414
    %vm429 = vmand %vm408, %vm414
    %vm430 = vmand %vm409, %vm414
    %vm431 = vmxor %vm394, 1
    %vm432 = vmxor %vm395, 1
    %vm433 = vmxor %vm396, 1
    %vm434 = vmxor %vm397, 1
    %vm435 = vmxor %vm398, 1
    %vm436 = vmxor %vm399, 1
    %vm437 = vmxor %vm400, 1
    %vm438 = vmxor %vm401, 1
    %vm439 = vmxor %vm402, 1
    %vm440 = vmxor %vm403, 1
    %vm441 = vmxor %vm404, 1
    %vm442 = vmxor %vm405, 1
    %vm443 = vmxor %vm406, 1
    %vm444 = vmxor %vm407, 1
    %vm445 = vmxor %vm408, 1
    %vm446 = vmxor %vm409, 1
    %vm447 = vmand %vm431, %vm414
    %vm448 = vmand %vm432, %vm414
    %vm449 = vmand %vm433, %vm414
    %vm450 = vmand %vm434, %vm414
    %vm451 = vmand %vm435, %vm414
    %vm452 = vmand %vm436, %vm414
    %vm453 = vmand %vm437, %vm414
    %vm454 = vmand %vm438, %vm414
    %vm455 = vmand %vm439, %vm414
    %vm456 = vmand %vm440, %vm414
    %vm457 = vmand %vm441, %vm414
    %vm458 = vmand %vm442, %vm414
    %vm459 = vmand %vm443, %vm414
    %vm460 = vmand %vm444, %vm414
    %vm461 = vmand %vm445, %vm414
    %vm462 = vmand %vm446, %vm414
    %v463 = vld [vmem:[#allocation2] sm:$0xff]
    %v464 = vld [vmem:[#allocation2 + $0x8] sm:$0xff]
    %v465 = vld [vmem:[#allocation2 + $0x10] sm:$0xff]
    %v466 = vld [vmem:[#allocation2 + $0x18] sm:$0xff]
    %v467 = vld [vmem:[#allocation2 + $0x20] sm:$0xff]
    %v468 = vld [vmem:[#allocation2 + $0x28] sm:$0xff]
    %v469 = vld [vmem:[#allocation2 + $0x30] sm:$0xff]
    %v470 = vld [vmem:[#allocation2 + $0x38] sm:$0xff]
    %v471 = vld [vmem:[#allocation2 + $0x40] sm:$0xff]
    %v472 = vld [vmem:[#allocation2 + $0x48] sm:$0xff]
    %v473 = vld [vmem:[#allocation2 + $0x50] sm:$0xff]
    %v474 = vld [vmem:[#allocation2 + $0x58] sm:$0xff]
    %v475 = vld [vmem:[#allocation2 + $0x60] sm:$0xff]
    %v476 = vld [vmem:[#allocation2 + $0x68] sm:$0xff]
    %v477 = vld [vmem:[#allocation2 + $0x70] sm:$0xff]
    %v478 = vld [vmem:[#allocation2 + $0x78] sm:$0xff]
    %v479 = vsel %vm415, %v312, -inf
    %v480 = vsel %vm416, %v313, -inf
    %v481 = vsel %vm417, %v314, -inf
    %v482 = vsel %vm418, %v315, -inf
    %v483 = vsel %vm419, %v316, -inf
    %v484 = vsel %vm420, %v317, -inf
    %v485 = vsel %vm421, %v318, -inf
    %v486 = vsel %vm422, %v319, -inf
    %v487 = vsel %vm423, %v320, -inf
    %v488 = vsel %vm424, %v321, -inf
    %v489 = vsel %vm425, %v322, -inf
    %v490 = vsel %vm426, %v323, -inf
    %v491 = vsel %vm427, %v324, -inf
    %v492 = vsel %vm428, %v325, -inf
    %v493 = vsel %vm429, %v326, -inf
    %v494 = vsel %vm430, %v327, -inf
    %495 = vmax.xlane.f32.xlu0 %v479
    %v496 = vpop.xlane.xlu0 %495
    %497 = vmax.xlane.f32.xlu0 %v480
    %v498 = vpop.xlane.xlu0 %497
    %499 = vmax.xlane.f32.xlu0 %v481
    %v500 = vpop.xlane.xlu0 %499
    %501 = vmax.xlane.f32.xlu0 %v482
    %v502 = vpop.xlane.xlu0 %501
    %503 = vmax.xlane.f32.xlu0 %v483
    %v504 = vpop.xlane.xlu0 %503
    %505 = vmax.xlane.f32.xlu0 %v484
    %v506 = vpop.xlane.xlu0 %505
    %507 = vmax.xlane.f32.xlu0 %v485
    %v508 = vpop.xlane.xlu0 %507
    %509 = vmax.xlane.f32.xlu0 %v486
    %v510 = vpop.xlane.xlu0 %509
    %511 = vmax.xlane.f32.xlu0 %v487
    %v512 = vpop.xlane.xlu0 %511
    %513 = vmax.xlane.f32.xlu0 %v488
    %v514 = vpop.xlane.xlu0 %513
    %515 = vmax.xlane.f32.xlu0 %v489
    %v516 = vpop.xlane.xlu0 %515
    %517 = vmax.xlane.f32.xlu0 %v490
    %v518 = vpop.xlane.xlu0 %517
    %519 = vmax.xlane.f32.xlu0 %v491
    %v520 = vpop.xlane.xlu0 %519
    %521 = vmax.xlane.f32.xlu0 %v492
    %v522 = vpop.xlane.xlu0 %521
    %523 = vmax.xlane.f32.xlu0 %v493
    %v524 = vpop.xlane.xlu0 %523
    %525 = vmax.xlane.f32.xlu0 %v494
    %v526 = vpop.xlane.xlu0 %525
    %v527 = vmax.f32 %v463, %v496
    %v528 = vmax.f32 %v464, %v498
    %v529 = vmax.f32 %v465, %v500
    %v530 = vmax.f32 %v466, %v502
    %v531 = vmax.f32 %v467, %v504
    %v532 = vmax.f32 %v468, %v506
    %v533 = vmax.f32 %v469, %v508
    %v534 = vmax.f32 %v470, %v510
    %v535 = vmax.f32 %v471, %v512
    %v536 = vmax.f32 %v472, %v514
    %v537 = vmax.f32 %v473, %v516
    %v538 = vmax.f32 %v474, %v518
    %v539 = vmax.f32 %v475, %v520
    %v540 = vmax.f32 %v476, %v522
    %v541 = vmax.f32 %v477, %v524
    %v542 = vmax.f32 %v478, %v526
    %vm543 = vcmask 7168
    %544 = vst.msk [vmem:[#allocation2] sm:$0xff] %vm543, %v527
    %545 = vst.msk [vmem:[#allocation2 + $0x8] sm:$0xff] %vm543, %v528
    %546 = vst.msk [vmem:[#allocation2 + $0x10] sm:$0xff] %vm543, %v529
    %547 = vst.msk [vmem:[#allocation2 + $0x18] sm:$0xff] %vm543, %v530
    %548 = vst.msk [vmem:[#allocation2 + $0x20] sm:$0xff] %vm543, %v531
    %549 = vst.msk [vmem:[#allocation2 + $0x28] sm:$0xff] %vm543, %v532
    %550 = vst.msk [vmem:[#allocation2 + $0x30] sm:$0xff] %vm543, %v533
    %551 = vst.msk [vmem:[#allocation2 + $0x38] sm:$0xff] %vm543, %v534
    %552 = vst.msk [vmem:[#allocation2 + $0x40] sm:$0xff] %vm543, %v535
    %553 = vst.msk [vmem:[#allocation2 + $0x48] sm:$0xff] %vm543, %v536
    %554 = vst.msk [vmem:[#allocation2 + $0x50] sm:$0xff] %vm543, %v537
    %555 = vst.msk [vmem:[#allocation2 + $0x58] sm:$0xff] %vm543, %v538
    %556 = vst.msk [vmem:[#allocation2 + $0x60] sm:$0xff] %vm543, %v539
    %557 = vst.msk [vmem:[#allocation2 + $0x68] sm:$0xff] %vm543, %v540
    %558 = vst.msk [vmem:[#allocation2 + $0x70] sm:$0xff] %vm543, %v541
    %559 = vst.msk [vmem:[#allocation2 + $0x78] sm:$0xff] %vm543, %v542
    %v560 = vld [vmem:[#allocation3] sm:$0xff]
    %v561 = vld [vmem:[#allocation3 + $0x8] sm:$0xff]
    %v562 = vld [vmem:[#allocation3 + $0x10] sm:$0xff]
    %v563 = vld [vmem:[#allocation3 + $0x18] sm:$0xff]
    %v564 = vld [vmem:[#allocation3 + $0x20] sm:$0xff]
    %v565 = vld [vmem:[#allocation3 + $0x28] sm:$0xff]
    %v566 = vld [vmem:[#allocation3 + $0x30] sm:$0xff]
    %v567 = vld [vmem:[#allocation3 + $0x38] sm:$0xff]
    %v568 = vld [vmem:[#allocation3 + $0x40] sm:$0xff]
    %v569 = vld [vmem:[#allocation3 + $0x48] sm:$0xff]
    %v570 = vld [vmem:[#allocation3 + $0x50] sm:$0xff]
    %v571 = vld [vmem:[#allocation3 + $0x58] sm:$0xff]
    %v572 = vld [vmem:[#allocation3 + $0x60] sm:$0xff]
    %v573 = vld [vmem:[#allocation3 + $0x68] sm:$0xff]
    %v574 = vld [vmem:[#allocation3 + $0x70] sm:$0xff]
    %v575 = vld [vmem:[#allocation3 + $0x78] sm:$0xff]
    %v576 = vsel %vm447, %v312, inf
    %v577 = vsel %vm448, %v313, inf
    %v578 = vsel %vm449, %v314, inf
    %v579 = vsel %vm450, %v315, inf
    %v580 = vsel %vm451, %v316, inf
    %v581 = vsel %vm452, %v317, inf
    %v582 = vsel %vm453, %v318, inf
    %v583 = vsel %vm454, %v319, inf
    %v584 = vsel %vm455, %v320, inf
    %v585 = vsel %vm456, %v321, inf
    %v586 = vsel %vm457, %v322, inf
    %v587 = vsel %vm458, %v323, inf
    %v588 = vsel %vm459, %v324, inf
    %v589 = vsel %vm460, %v325, inf
    %v590 = vsel %vm461, %v326, inf
    %v591 = vsel %vm462, %v327, inf
    %592 = vmin.xlane.f32.xlu0 %v576
    %v593 = vpop.xlane.xlu0 %592
    %594 = vmin.xlane.f32.xlu0 %v577
    %v595 = vpop.xlane.xlu0 %594
    %596 = vmin.xlane.f32.xlu0 %v578
    %v597 = vpop.xlane.xlu0 %596
    %598 = vmin.xlane.f32.xlu0 %v579
    %v599 = vpop.xlane.xlu0 %598
    %600 = vmin.xlane.f32.xlu0 %v580
    %v601 = vpop.xlane.xlu0 %600
    %602 = vmin.xlane.f32.xlu0 %v581
    %v603 = vpop.xlane.xlu0 %602
    %604 = vmin.xlane.f32.xlu0 %v582
    %v605 = vpop.xlane.xlu0 %604
    %606 = vmin.xlane.f32.xlu0 %v583
    %v607 = vpop.xlane.xlu0 %606
    %608 = vmin.xlane.f32.xlu0 %v584
    %v609 = vpop.xlane.xlu0 %608
    %610 = vmin.xlane.f32.xlu0 %v585
    %v611 = vpop.xlane.xlu0 %610
    %612 = vmin.xlane.f32.xlu0 %v586
    %v613 = vpop.xlane.xlu0 %612
    %614 = vmin.xlane.f32.xlu0 %v587
    %v615 = vpop.xlane.xlu0 %614
    %616 = vmin.xlane.f32.xlu0 %v588
    %v617 = vpop.xlane.xlu0 %616
    %618 = vmin.xlane.f32.xlu0 %v589
    %v619 = vpop.xlane.xlu0 %618
    %620 = vmin.xlane.f32.xlu0 %v590
    %v621 = vpop.xlane.xlu0 %620
    %622 = vmin.xlane.f32.xlu0 %v591
    %v623 = vpop.xlane.xlu0 %622
    %v624 = vmin.f32 %v560, %v593
    %v625 = vmin.f32 %v561, %v595
    %v626 = vmin.f32 %v562, %v597
    %v627 = vmin.f32 %v563, %v599
    %v628 = vmin.f32 %v564, %v601
    %v629 = vmin.f32 %v565, %v603
    %v630 = vmin.f32 %v566, %v605
    %v631 = vmin.f32 %v567, %v607
    %v632 = vmin.f32 %v568, %v609
    %v633 = vmin.f32 %v569, %v611
    %v634 = vmin.f32 %v570, %v613
    %v635 = vmin.f32 %v571, %v615
    %v636 = vmin.f32 %v572, %v617
    %v637 = vmin.f32 %v573, %v619
    %v638 = vmin.f32 %v574, %v621
    %v639 = vmin.f32 %v575, %v623
    %640 = vst.msk [vmem:[#allocation3] sm:$0xff] %vm543, %v624
    %641 = vst.msk [vmem:[#allocation3 + $0x8] sm:$0xff] %vm543, %v625
    %642 = vst.msk [vmem:[#allocation3 + $0x10] sm:$0xff] %vm543, %v626
    %643 = vst.msk [vmem:[#allocation3 + $0x18] sm:$0xff] %vm543, %v627
    %644 = vst.msk [vmem:[#allocation3 + $0x20] sm:$0xff] %vm543, %v628
    %645 = vst.msk [vmem:[#allocation3 + $0x28] sm:$0xff] %vm543, %v629
    %646 = vst.msk [vmem:[#allocation3 + $0x30] sm:$0xff] %vm543, %v630
    %647 = vst.msk [vmem:[#allocation3 + $0x38] sm:$0xff] %vm543, %v631
    %648 = vst.msk [vmem:[#allocation3 + $0x40] sm:$0xff] %vm543, %v632
    %649 = vst.msk [vmem:[#allocation3 + $0x48] sm:$0xff] %vm543, %v633
    %650 = vst.msk [vmem:[#allocation3 + $0x50] sm:$0xff] %vm543, %v634
    %651 = vst.msk [vmem:[#allocation3 + $0x58] sm:$0xff] %vm543, %v635
    %652 = vst.msk [vmem:[#allocation3 + $0x60] sm:$0xff] %vm543, %v636
    %653 = vst.msk [vmem:[#allocation3 + $0x68] sm:$0xff] %vm543, %v637
    %654 = vst.msk [vmem:[#allocation3 + $0x70] sm:$0xff] %vm543, %v638
    %655 = vst.msk [vmem:[#allocation3 + $0x78] sm:$0xff] %vm543, %v639
    // Predicated region
    $region38: #{tpu_custom_call.1} parent=1 // pred_check
      %p656 = pneg %p30
    $region39: #{tpu_custom_call.1} parent=1 // pred_check_branch
      %658 = sbr.rel (%p656) target = $region41
    $region40: #{tpu_custom_call.1} parent=1 // pred_region
      %v659 = vld [vmem:[#allocation2] sm:$0xff]
      %v660 = vld [vmem:[#allocation2 + $0x8] sm:$0xff]
      %v661 = vld [vmem:[#allocation2 + $0x10] sm:$0xff]
      %v662 = vld [vmem:[#allocation2 + $0x18] sm:$0xff]
      %v663 = vld [vmem:[#allocation2 + $0x20] sm:$0xff]
      %v664 = vld [vmem:[#allocation2 + $0x28] sm:$0xff]
      %v665 = vld [vmem:[#allocation2 + $0x30] sm:$0xff]
      %v666 = vld [vmem:[#allocation2 + $0x38] sm:$0xff]
      %v667 = vld [vmem:[#allocation2 + $0x40] sm:$0xff]
      %v668 = vld [vmem:[#allocation2 + $0x48] sm:$0xff]
      %v669 = vld [vmem:[#allocation2 + $0x50] sm:$0xff]
      %v670 = vld [vmem:[#allocation2 + $0x58] sm:$0xff]
      %v671 = vld [vmem:[#allocation2 + $0x60] sm:$0xff]
      %v672 = vld [vmem:[#allocation2 + $0x68] sm:$0xff]
      %v673 = vld [vmem:[#allocation2 + $0x70] sm:$0xff]
      %v674 = vld [vmem:[#allocation2 + $0x78] sm:$0xff]
      %v675 = vmax.f32 %v659, 0.0
      %v676 = vmax.f32 %v660, 0.0
      %v677 = vmax.f32 %v661, 0.0
      %v678 = vmax.f32 %v662, 0.0
      %v679 = vmax.f32 %v663, 0.0
      %v680 = vmax.f32 %v664, 0.0
      %v681 = vmax.f32 %v665, 0.0
      %v682 = vmax.f32 %v666, 0.0
      %v683 = vmax.f32 %v667, 0.0
      %v684 = vmax.f32 %v668, 0.0
      %v685 = vmax.f32 %v669, 0.0
      %v686 = vmax.f32 %v670, 0.0
      %v687 = vmax.f32 %v671, 0.0
      %v688 = vmax.f32 %v672, 0.0
      %v689 = vmax.f32 %v673, 0.0
      %v690 = vmax.f32 %v674, 0.0
      %v691 = vrsqrt.pop %v675
      %v692 = vmul.f32 %v691, %v675
      %v693 = vmul.f32 %v692, %v691
      %v694 = vmul.f32 0.5, %v693
      %v695 = vsub.f32 1.5, %v694
      %v696 = vmul.f32 %v691, %v695
      %v697 = vmul.f32 %v675, %v696
      %vm698 = vcmp.eq.f32.partialorder %v675, inf
      %v699 = vsel %vm698, %v675, %v697
      %vm700 = vcmp.eq.f32.partialorder %v675, 0.0
      %v701 = vand.u32 %v675, 2147483648
      %v702 = vsel %vm700, %v701, %v699
      %v703 = vrsqrt.pop %v676
      %v704 = vmul.f32 %v703, %v676
      %v705 = vmul.f32 %v704, %v703
      %v706 = vmul.f32 0.5, %v705
      %v707 = vsub.f32 1.5, %v706
      %v708 = vmul.f32 %v703, %v707
      %v709 = vmul.f32 %v676, %v708
      %vm710 = vcmp.eq.f32.partialorder %v676, inf
      %v711 = vsel %vm710, %v676, %v709
      %vm712 = vcmp.eq.f32.partialorder %v676, 0.0
      %v713 = vand.u32 %v676, 2147483648
      %v714 = vsel %vm712, %v713, %v711
      %v715 = vrsqrt.pop %v677
      %v716 = vmul.f32 %v715, %v677
      %v717 = vmul.f32 %v716, %v715
      %v718 = vmul.f32 0.5, %v717
      %v719 = vsub.f32 1.5, %v718
      %v720 = vmul.f32 %v715, %v719
      %v721 = vmul.f32 %v677, %v720
      %vm722 = vcmp.eq.f32.partialorder %v677, inf
      %v723 = vsel %vm722, %v677, %v721
      %vm724 = vcmp.eq.f32.partialorder %v677, 0.0
      %v725 = vand.u32 %v677, 2147483648
      %v726 = vsel %vm724, %v725, %v723
      %v727 = vrsqrt.pop %v678
      %v728 = vmul.f32 %v727, %v678
      %v729 = vmul.f32 %v728, %v727
      %v730 = vmul.f32 0.5, %v729
      %v731 = vsub.f32 1.5, %v730
      %v732 = vmul.f32 %v727, %v731
      %v733 = vmul.f32 %v678, %v732
      %vm734 = vcmp.eq.f32.partialorder %v678, inf
      %v735 = vsel %vm734, %v678, %v733
      %vm736 = vcmp.eq.f32.partialorder %v678, 0.0
      %v737 = vand.u32 %v678, 2147483648
      %v738 = vsel %vm736, %v737, %v735
      %v739 = vrsqrt.pop %v679
      %v740 = vmul.f32 %v739, %v679
      %v741 = vmul.f32 %v740, %v739
      %v742 = vmul.f32 0.5, %v741
      %v743 = vsub.f32 1.5, %v742
      %v744 = vmul.f32 %v739, %v743
      %v745 = vmul.f32 %v679, %v744
      %vm746 = vcmp.eq.f32.partialorder %v679, inf
      %v747 = vsel %vm746, %v679, %v745
      %vm748 = vcmp.eq.f32.partialorder %v679, 0.0
      %v749 = vand.u32 %v679, 2147483648
      %v750 = vsel %vm748, %v749, %v747
      %v751 = vrsqrt.pop %v680
      %v752 = vmul.f32 %v751, %v680
      %v753 = vmul.f32 %v752, %v751
      %v754 = vmul.f32 0.5, %v753
      %v755 = vsub.f32 1.5, %v754
      %v756 = vmul.f32 %v751, %v755
      %v757 = vmul.f32 %v680, %v756
      %vm758 = vcmp.eq.f32.partialorder %v680, inf
      %v759 = vsel %vm758, %v680, %v757
      %vm760 = vcmp.eq.f32.partialorder %v680, 0.0
      %v761 = vand.u32 %v680, 2147483648
      %v762 = vsel %vm760, %v761, %v759
      %v763 = vrsqrt.pop %v681
      %v764 = vmul.f32 %v763, %v681
      %v765 = vmul.f32 %v764, %v763
      %v766 = vmul.f32 0.5, %v765
      %v767 = vsub.f32 1.5, %v766
      %v768 = vmul.f32 %v763, %v767
      %v769 = vmul.f32 %v681, %v768
      %vm770 = vcmp.eq.f32.partialorder %v681, inf
      %v771 = vsel %vm770, %v681, %v769
      %vm772 = vcmp.eq.f32.partialorder %v681, 0.0
      %v773 = vand.u32 %v681, 2147483648
      %v774 = vsel %vm772, %v773, %v771
      %v775 = vrsqrt.pop %v682
      %v776 = vmul.f32 %v775, %v682
      %v777 = vmul.f32 %v776, %v775
      %v778 = vmul.f32 0.5, %v777
      %v779 = vsub.f32 1.5, %v778
      %v780 = vmul.f32 %v775, %v779
      %v781 = vmul.f32 %v682, %v780
      %vm782 = vcmp.eq.f32.partialorder %v682, inf
      %v783 = vsel %vm782, %v682, %v781
      %vm784 = vcmp.eq.f32.partialorder %v682, 0.0
      %v785 = vand.u32 %v682, 2147483648
      %v786 = vsel %vm784, %v785, %v783
      %v787 = vrsqrt.pop %v683
      %v788 = vmul.f32 %v787, %v683
      %v789 = vmul.f32 %v788, %v787
      %v790 = vmul.f32 0.5, %v789
      %v791 = vsub.f32 1.5, %v790
      %v792 = vmul.f32 %v787, %v791
      %v793 = vmul.f32 %v683, %v792
      %vm794 = vcmp.eq.f32.partialorder %v683, inf
      %v795 = vsel %vm794, %v683, %v793
      %vm796 = vcmp.eq.f32.partialorder %v683, 0.0
      %v797 = vand.u32 %v683, 2147483648
      %v798 = vsel %vm796, %v797, %v795
      %v799 = vrsqrt.pop %v684
      %v800 = vmul.f32 %v799, %v684
      %v801 = vmul.f32 %v800, %v799
      %v802 = vmul.f32 0.5, %v801
      %v803 = vsub.f32 1.5, %v802
      %v804 = vmul.f32 %v799, %v803
      %v805 = vmul.f32 %v684, %v804
      %vm806 = vcmp.eq.f32.partialorder %v684, inf
      %v807 = vsel %vm806, %v684, %v805
      %vm808 = vcmp.eq.f32.partialorder %v684, 0.0
      %v809 = vand.u32 %v684, 2147483648
      %v810 = vsel %vm808, %v809, %v807
      %v811 = vrsqrt.pop %v685
      %v812 = vmul.f32 %v811, %v685
      %v813 = vmul.f32 %v812, %v811
      %v814 = vmul.f32 0.5, %v813
      %v815 = vsub.f32 1.5, %v814
      %v816 = vmul.f32 %v811, %v815
      %v817 = vmul.f32 %v685, %v816
      %vm818 = vcmp.eq.f32.partialorder %v685, inf
      %v819 = vsel %vm818, %v685, %v817
      %vm820 = vcmp.eq.f32.partialorder %v685, 0.0
      %v821 = vand.u32 %v685, 2147483648
      %v822 = vsel %vm820, %v821, %v819
      %v823 = vrsqrt.pop %v686
      %v824 = vmul.f32 %v823, %v686
      %v825 = vmul.f32 %v824, %v823
      %v826 = vmul.f32 0.5, %v825
      %v827 = vsub.f32 1.5, %v826
      %v828 = vmul.f32 %v823, %v827
      %v829 = vmul.f32 %v686, %v828
      %vm830 = vcmp.eq.f32.partialorder %v686, inf
      %v831 = vsel %vm830, %v686, %v829
      %vm832 = vcmp.eq.f32.partialorder %v686, 0.0
      %v833 = vand.u32 %v686, 2147483648
      %v834 = vsel %vm832, %v833, %v831
      %v835 = vrsqrt.pop %v687
      %v836 = vmul.f32 %v835, %v687
      %v837 = vmul.f32 %v836, %v835
      %v838 = vmul.f32 0.5, %v837
      %v839 = vsub.f32 1.5, %v838
      %v840 = vmul.f32 %v835, %v839
      %v841 = vmul.f32 %v687, %v840
      %vm842 = vcmp.eq.f32.partialorder %v687, inf
      %v843 = vsel %vm842, %v687, %v841
      %vm844 = vcmp.eq.f32.partialorder %v687, 0.0
      %v845 = vand.u32 %v687, 2147483648
      %v846 = vsel %vm844, %v845, %v843
      %v847 = vrsqrt.pop %v688
      %v848 = vmul.f32 %v847, %v688
      %v849 = vmul.f32 %v848, %v847
      %v850 = vmul.f32 0.5, %v849
      %v851 = vsub.f32 1.5, %v850
      %v852 = vmul.f32 %v847, %v851
      %v853 = vmul.f32 %v688, %v852
      %vm854 = vcmp.eq.f32.partialorder %v688, inf
      %v855 = vsel %vm854, %v688, %v853
      %vm856 = vcmp.eq.f32.partialorder %v688, 0.0
      %v857 = vand.u32 %v688, 2147483648
      %v858 = vsel %vm856, %v857, %v855
      %v859 = vrsqrt.pop %v689
      %v860 = vmul.f32 %v859, %v689
      %v861 = vmul.f32 %v860, %v859
      %v862 = vmul.f32 0.5, %v861
      %v863 = vsub.f32 1.5, %v862
      %v864 = vmul.f32 %v859, %v863
      %v865 = vmul.f32 %v689, %v864
      %vm866 = vcmp.eq.f32.partialorder %v689, inf
      %v867 = vsel %vm866, %v689, %v865
      %vm868 = vcmp.eq.f32.partialorder %v689, 0.0
      %v869 = vand.u32 %v689, 2147483648
      %v870 = vsel %vm868, %v869, %v867
      %v871 = vrsqrt.pop %v690
      %v872 = vmul.f32 %v871, %v690
      %v873 = vmul.f32 %v872, %v871
      %v874 = vmul.f32 0.5, %v873
      %v875 = vsub.f32 1.5, %v874
      %v876 = vmul.f32 %v871, %v875
      %v877 = vmul.f32 %v690, %v876
      %vm878 = vcmp.eq.f32.partialorder %v690, inf
      %v879 = vsel %vm878, %v690, %v877
      %vm880 = vcmp.eq.f32.partialorder %v690, 0.0
      %v881 = vand.u32 %v690, 2147483648
      %v882 = vsel %vm880, %v881, %v879
      %v883 = vld [vmem:[#allocation3] sm:$0xff]
      %v884 = vld [vmem:[#allocation3 + $0x8] sm:$0xff]
      %v885 = vld [vmem:[#allocation3 + $0x10] sm:$0xff]
      %v886 = vld [vmem:[#allocation3 + $0x18] sm:$0xff]
      %v887 = vld [vmem:[#allocation3 + $0x20] sm:$0xff]
      %v888 = vld [vmem:[#allocation3 + $0x28] sm:$0xff]
      %v889 = vld [vmem:[#allocation3 + $0x30] sm:$0xff]
      %v890 = vld [vmem:[#allocation3 + $0x38] sm:$0xff]
      %v891 = vld [vmem:[#allocation3 + $0x40] sm:$0xff]
      %v892 = vld [vmem:[#allocation3 + $0x48] sm:$0xff]
      %v893 = vld [vmem:[#allocation3 + $0x50] sm:$0xff]
      %v894 = vld [vmem:[#allocation3 + $0x58] sm:$0xff]
      %v895 = vld [vmem:[#allocation3 + $0x60] sm:$0xff]
      %v896 = vld [vmem:[#allocation3 + $0x68] sm:$0xff]
      %v897 = vld [vmem:[#allocation3 + $0x70] sm:$0xff]
      %v898 = vld [vmem:[#allocation3 + $0x78] sm:$0xff]
      %v899 = vrsqrt.pop %v883
      %v900 = vmul.f32 %v899, %v883
      %v901 = vmul.f32 %v900, %v899
      %v902 = vmul.f32 0.5, %v901
      %v903 = vsub.f32 1.5, %v902
      %v904 = vmul.f32 %v899, %v903
      %v905 = vmul.f32 %v883, %v904
      %vm906 = vcmp.eq.f32.partialorder %v883, inf
      %v907 = vsel %vm906, %v883, %v905
      %vm908 = vcmp.eq.f32.partialorder %v883, 0.0
      %v909 = vand.u32 %v883, 2147483648
      %v910 = vsel %vm908, %v909, %v907
      %v911 = vrsqrt.pop %v884
      %v912 = vmul.f32 %v911, %v884
      %v913 = vmul.f32 %v912, %v911
      %v914 = vmul.f32 0.5, %v913
      %v915 = vsub.f32 1.5, %v914
      %v916 = vmul.f32 %v911, %v915
      %v917 = vmul.f32 %v884, %v916
      %vm918 = vcmp.eq.f32.partialorder %v884, inf
      %v919 = vsel %vm918, %v884, %v917
      %vm920 = vcmp.eq.f32.partialorder %v884, 0.0
      %v921 = vand.u32 %v884, 2147483648
      %v922 = vsel %vm920, %v921, %v919
      %v923 = vrsqrt.pop %v885
      %v924 = vmul.f32 %v923, %v885
      %v925 = vmul.f32 %v924, %v923
      %v926 = vmul.f32 0.5, %v925
      %v927 = vsub.f32 1.5, %v926
      %v928 = vmul.f32 %v923, %v927
      %v929 = vmul.f32 %v885, %v928
      %vm930 = vcmp.eq.f32.partialorder %v885, inf
      %v931 = vsel %vm930, %v885, %v929
      %vm932 = vcmp.eq.f32.partialorder %v885, 0.0
      %v933 = vand.u32 %v885, 2147483648
      %v934 = vsel %vm932, %v933, %v931
      %v935 = vrsqrt.pop %v886
      %v936 = vmul.f32 %v935, %v886
      %v937 = vmul.f32 %v936, %v935
      %v938 = vmul.f32 0.5, %v937
      %v939 = vsub.f32 1.5, %v938
      %v940 = vmul.f32 %v935, %v939
      %v941 = vmul.f32 %v886, %v940
      %vm942 = vcmp.eq.f32.partialorder %v886, inf
      %v943 = vsel %vm942, %v886, %v941
      %vm944 = vcmp.eq.f32.partialorder %v886, 0.0
      %v945 = vand.u32 %v886, 2147483648
      %v946 = vsel %vm944, %v945, %v943
      %v947 = vrsqrt.pop %v887
      %v948 = vmul.f32 %v947, %v887
      %v949 = vmul.f32 %v948, %v947
      %v950 = vmul.f32 0.5, %v949
      %v951 = vsub.f32 1.5, %v950
      %v952 = vmul.f32 %v947, %v951
      %v953 = vmul.f32 %v887, %v952
      %vm954 = vcmp.eq.f32.partialorder %v887, inf
      %v955 = vsel %vm954, %v887, %v953
      %vm956 = vcmp.eq.f32.partialorder %v887, 0.0
      %v957 = vand.u32 %v887, 2147483648
      %v958 = vsel %vm956, %v957, %v955
      %v959 = vrsqrt.pop %v888
      %v960 = vmul.f32 %v959, %v888
      %v961 = vmul.f32 %v960, %v959
      %v962 = vmul.f32 0.5, %v961
      %v963 = vsub.f32 1.5, %v962
      %v964 = vmul.f32 %v959, %v963
      %v965 = vmul.f32 %v888, %v964
      %vm966 = vcmp.eq.f32.partialorder %v888, inf
      %v967 = vsel %vm966, %v888, %v965
      %vm968 = vcmp.eq.f32.partialorder %v888, 0.0
      %v969 = vand.u32 %v888, 2147483648
      %v970 = vsel %vm968, %v969, %v967
      %v971 = vrsqrt.pop %v889
      %v972 = vmul.f32 %v971, %v889
      %v973 = vmul.f32 %v972, %v971
      %v974 = vmul.f32 0.5, %v973
      %v975 = vsub.f32 1.5, %v974
      %v976 = vmul.f32 %v971, %v975
      %v977 = vmul.f32 %v889, %v976
      %vm978 = vcmp.eq.f32.partialorder %v889, inf
      %v979 = vsel %vm978, %v889, %v977
      %vm980 = vcmp.eq.f32.partialorder %v889, 0.0
      %v981 = vand.u32 %v889, 2147483648
      %v982 = vsel %vm980, %v981, %v979
      %v983 = vrsqrt.pop %v890
      %v984 = vmul.f32 %v983, %v890
      %v985 = vmul.f32 %v984, %v983
      %v986 = vmul.f32 0.5, %v985
      %v987 = vsub.f32 1.5, %v986
      %v988 = vmul.f32 %v983, %v987
      %v989 = vmul.f32 %v890, %v988
      %vm990 = vcmp.eq.f32.partialorder %v890, inf
      %v991 = vsel %vm990, %v890, %v989
      %vm992 = vcmp.eq.f32.partialorder %v890, 0.0
      %v993 = vand.u32 %v890, 2147483648
      %v994 = vsel %vm992, %v993, %v991
      %v995 = vrsqrt.pop %v891
      %v996 = vmul.f32 %v995, %v891
      %v997 = vmul.f32 %v996, %v995
      %v998 = vmul.f32 0.5, %v997
      %v999 = vsub.f32 1.5, %v998
      %v1000 = vmul.f32 %v995, %v999
      %v1001 = vmul.f32 %v891, %v1000
      %vm1002 = vcmp.eq.f32.partialorder %v891, inf
      %v1003 = vsel %vm1002, %v891, %v1001
      %vm1004 = vcmp.eq.f32.partialorder %v891, 0.0
      %v1005 = vand.u32 %v891, 2147483648
      %v1006 = vsel %vm1004, %v1005, %v1003
      %v1007 = vrsqrt.pop %v892
      %v1008 = vmul.f32 %v1007, %v892
      %v1009 = vmul.f32 %v1008, %v1007
      %v1010 = vmul.f32 0.5, %v1009
      %v1011 = vsub.f32 1.5, %v1010
      %v1012 = vmul.f32 %v1007, %v1011
      %v1013 = vmul.f32 %v892, %v1012
      %vm1014 = vcmp.eq.f32.partialorder %v892, inf
      %v1015 = vsel %vm1014, %v892, %v1013
      %vm1016 = vcmp.eq.f32.partialorder %v892, 0.0
      %v1017 = vand.u32 %v892, 2147483648
      %v1018 = vsel %vm1016, %v1017, %v1015
      %v1019 = vrsqrt.pop %v893
      %v1020 = vmul.f32 %v1019, %v893
      %v1021 = vmul.f32 %v1020, %v1019
      %v1022 = vmul.f32 0.5, %v1021
      %v1023 = vsub.f32 1.5, %v1022
      %v1024 = vmul.f32 %v1019, %v1023
      %v1025 = vmul.f32 %v893, %v1024
      %vm1026 = vcmp.eq.f32.partialorder %v893, inf
      %v1027 = vsel %vm1026, %v893, %v1025
      %vm1028 = vcmp.eq.f32.partialorder %v893, 0.0
      %v1029 = vand.u32 %v893, 2147483648
      %v1030 = vsel %vm1028, %v1029, %v1027
      %v1031 = vrsqrt.pop %v894
      %v1032 = vmul.f32 %v1031, %v894
      %v1033 = vmul.f32 %v1032, %v1031
      %v1034 = vmul.f32 0.5, %v1033
      %v1035 = vsub.f32 1.5, %v1034
      %v1036 = vmul.f32 %v1031, %v1035
      %v1037 = vmul.f32 %v894, %v1036
      %vm1038 = vcmp.eq.f32.partialorder %v894, inf
      %v1039 = vsel %vm1038, %v894, %v1037
      %vm1040 = vcmp.eq.f32.partialorder %v894, 0.0
      %v1041 = vand.u32 %v894, 2147483648
      %v1042 = vsel %vm1040, %v1041, %v1039
      %v1043 = vrsqrt.pop %v895
      %v1044 = vmul.f32 %v1043, %v895
      %v1045 = vmul.f32 %v1044, %v1043
      %v1046 = vmul.f32 0.5, %v1045
      %v1047 = vsub.f32 1.5, %v1046
      %v1048 = vmul.f32 %v1043, %v1047
      %v1049 = vmul.f32 %v895, %v1048
      %vm1050 = vcmp.eq.f32.partialorder %v895, inf
      %v1051 = vsel %vm1050, %v895, %v1049
      %vm1052 = vcmp.eq.f32.partialorder %v895, 0.0
      %v1053 = vand.u32 %v895, 2147483648
      %v1054 = vsel %vm1052, %v1053, %v1051
      %v1055 = vrsqrt.pop %v896
      %v1056 = vmul.f32 %v1055, %v896
      %v1057 = vmul.f32 %v1056, %v1055
      %v1058 = vmul.f32 0.5, %v1057
      %v1059 = vsub.f32 1.5, %v1058
      %v1060 = vmul.f32 %v1055, %v1059
      %v1061 = vmul.f32 %v896, %v1060
      %vm1062 = vcmp.eq.f32.partialorder %v896, inf
      %v1063 = vsel %vm1062, %v896, %v1061
      %vm1064 = vcmp.eq.f32.partialorder %v896, 0.0
      %v1065 = vand.u32 %v896, 2147483648
      %v1066 = vsel %vm1064, %v1065, %v1063
      %v1067 = vrsqrt.pop %v897
      %v1068 = vmul.f32 %v1067, %v897
      %v1069 = vmul.f32 %v1068, %v1067
      %v1070 = vmul.f32 0.5, %v1069
      %v1071 = vsub.f32 1.5, %v1070
      %v1072 = vmul.f32 %v1067, %v1071
      %v1073 = vmul.f32 %v897, %v1072
      %vm1074 = vcmp.eq.f32.partialorder %v897, inf
      %v1075 = vsel %vm1074, %v897, %v1073
      %vm1076 = vcmp.eq.f32.partialorder %v897, 0.0
      %v1077 = vand.u32 %v897, 2147483648
      %v1078 = vsel %vm1076, %v1077, %v1075
      %v1079 = vrsqrt.pop %v898
      %v1080 = vmul.f32 %v1079, %v898
      %v1081 = vmul.f32 %v1080, %v1079
      %v1082 = vmul.f32 0.5, %v1081
      %v1083 = vsub.f32 1.5, %v1082
      %v1084 = vmul.f32 %v1079, %v1083
      %v1085 = vmul.f32 %v898, %v1084
      %vm1086 = vcmp.eq.f32.partialorder %v898, inf
      %v1087 = vsel %vm1086, %v898, %v1085
      %vm1088 = vcmp.eq.f32.partialorder %v898, 0.0
      %v1089 = vand.u32 %v898, 2147483648
      %v1090 = vsel %vm1088, %v1089, %v1087
      %v1091 = vsub.f32 %v702, %v910
      %v1092 = vsub.f32 %v714, %v922
      %v1093 = vsub.f32 %v726, %v934
      %v1094 = vsub.f32 %v738, %v946
      %v1095 = vsub.f32 %v750, %v958
      %v1096 = vsub.f32 %v762, %v970
      %v1097 = vsub.f32 %v774, %v982
      %v1098 = vsub.f32 %v786, %v994
      %v1099 = vsub.f32 %v798, %v1006
      %v1100 = vsub.f32 %v810, %v1018
      %v1101 = vsub.f32 %v822, %v1030
      %v1102 = vsub.f32 %v834, %v1042
      %v1103 = vsub.f32 %v846, %v1054
      %v1104 = vsub.f32 %v858, %v1066
      %v1105 = vsub.f32 %v870, %v1078
      %v1106 = vsub.f32 %v882, %v1090
      %v1107 = vadd.f32 %v1091, 5.0
      %v1108 = vadd.f32 %v1092, 5.0
      %v1109 = vadd.f32 %v1093, 5.0
      %v1110 = vadd.f32 %v1094, 5.0
      %v1111 = vadd.f32 %v1095, 5.0
      %v1112 = vadd.f32 %v1096, 5.0
      %v1113 = vadd.f32 %v1097, 5.0
      %v1114 = vadd.f32 %v1098, 5.0
      %v1115 = vadd.f32 %v1099, 5.0
      %v1116 = vadd.f32 %v1100, 5.0
      %v1117 = vadd.f32 %v1101, 5.0
      %v1118 = vadd.f32 %v1102, 5.0
      %v1119 = vadd.f32 %v1103, 5.0
      %v1120 = vadd.f32 %v1104, 5.0
      %v1121 = vadd.f32 %v1105, 5.0
      %v1122 = vadd.f32 %v1106, 5.0
      %v1123 = vmax.f32 %v1107, 0.0
      %v1124 = vmax.f32 %v1108, 0.0
      %v1125 = vmax.f32 %v1109, 0.0
      %v1126 = vmax.f32 %v1110, 0.0
      %v1127 = vmax.f32 %v1111, 0.0
      %v1128 = vmax.f32 %v1112, 0.0
      %v1129 = vmax.f32 %v1113, 0.0
      %v1130 = vmax.f32 %v1114, 0.0
      %v1131 = vmax.f32 %v1115, 0.0
      %v1132 = vmax.f32 %v1116, 0.0
      %v1133 = vmax.f32 %v1117, 0.0
      %v1134 = vmax.f32 %v1118, 0.0
      %v1135 = vmax.f32 %v1119, 0.0
      %v1136 = vmax.f32 %v1120, 0.0
      %v1137 = vmax.f32 %v1121, 0.0
      %v1138 = vmax.f32 %v1122, 0.0
      %v1139 = vld [vmem:[%s6] sm:$0xff]
      %v1140 = vld [vmem:[%s6 + $0x8] sm:$0xff]
      %v1141 = vld [vmem:[%s6 + $0x10] sm:$0xff]
      %v1142 = vld [vmem:[%s6 + $0x18] sm:$0xff]
      %v1143 = vld [vmem:[%s6 + $0x20] sm:$0xff]
      %v1144 = vld [vmem:[%s6 + $0x28] sm:$0xff]
      %v1145 = vld [vmem:[%s6 + $0x30] sm:$0xff]
      %v1146 = vld [vmem:[%s6 + $0x38] sm:$0xff]
      %v1147 = vld [vmem:[%s6 + $0x40] sm:$0xff]
      %v1148 = vld [vmem:[%s6 + $0x48] sm:$0xff]
      %v1149 = vld [vmem:[%s6 + $0x50] sm:$0xff]
      %v1150 = vld [vmem:[%s6 + $0x58] sm:$0xff]
      %v1151 = vld [vmem:[%s6 + $0x60] sm:$0xff]
      %v1152 = vld [vmem:[%s6 + $0x68] sm:$0xff]
      %v1153 = vld [vmem:[%s6 + $0x70] sm:$0xff]
      %v1154 = vld [vmem:[%s6 + $0x78] sm:$0xff]
      %v1155 = vmul.f32 %v1123, %v1139
      %v1156 = vmul.f32 %v1124, %v1140
      %v1157 = vmul.f32 %v1125, %v1141
      %v1158 = vmul.f32 %v1126, %v1142
      %v1159 = vmul.f32 %v1127, %v1143
      %v1160 = vmul.f32 %v1128, %v1144
      %v1161 = vmul.f32 %v1129, %v1145
      %v1162 = vmul.f32 %v1130, %v1146
      %v1163 = vmul.f32 %v1131, %v1147
      %v1164 = vmul.f32 %v1132, %v1148
      %v1165 = vmul.f32 %v1133, %v1149
      %v1166 = vmul.f32 %v1134, %v1150
      %v1167 = vmul.f32 %v1135, %v1151
      %v1168 = vmul.f32 %v1136, %v1152
      %v1169 = vmul.f32 %v1137, %v1153
      %v1170 = vmul.f32 %v1138, %v1154
      %v1171 = vsel %vm543, %v1155, 0.0
      %v1172 = vsel %vm543, %v1156, 0.0
      %v1173 = vadd.f32 %v1171, %v1172
      %v1174 = vsel %vm543, %v1157, 0.0
      %v1175 = vadd.f32 %v1173, %v1174
      %v1176 = vsel %vm543, %v1158, 0.0
      %v1177 = vadd.f32 %v1175, %v1176
      %v1178 = vsel %vm543, %v1159, 0.0
      %v1179 = vadd.f32 %v1177, %v1178
      %v1180 = vsel %vm543, %v1160, 0.0
      %v1181 = vadd.f32 %v1179, %v1180
      %v1182 = vsel %vm543, %v1161, 0.0
      %v1183 = vadd.f32 %v1181, %v1182
      %v1184 = vsel %vm543, %v1162, 0.0
      %v1185 = vadd.f32 %v1183, %v1184
      %v1186 = vsel %vm543, %v1163, 0.0
      %v1187 = vadd.f32 %v1185, %v1186
      %v1188 = vsel %vm543, %v1164, 0.0
      %v1189 = vadd.f32 %v1187, %v1188
      %v1190 = vsel %vm543, %v1165, 0.0
      %v1191 = vadd.f32 %v1189, %v1190
      %v1192 = vsel %vm543, %v1166, 0.0
      %v1193 = vadd.f32 %v1191, %v1192
      %v1194 = vsel %vm543, %v1167, 0.0
      %v1195 = vadd.f32 %v1193, %v1194
      %v1196 = vsel %vm543, %v1168, 0.0
      %v1197 = vadd.f32 %v1195, %v1196
      %v1198 = vsel %vm543, %v1169, 0.0
      %v1199 = vadd.f32 %v1197, %v1198
      %v1200 = vsel %vm543, %v1170, 0.0
      %v1201 = vadd.f32 %v1199, %v1200
      %1202 = vadd.xlane.f32.xlu0 %v1201
      %v1203 = vpop.xlane.xlu0 %1202
      %v1204 = vrot.slane %v1203, 4
      %v1205 = vadd.f32 %v1203, %v1204
      %v1206 = vrot.slane %v1205, 2
      %v1207 = vadd.f32 %v1205, %v1206
      %v1208 = vrot.slane %v1207, 1
      %v1209 = vadd.f32 %v1207, %v1208
      %s1210 = vtos %v1209
      %v1211 = vstv %s1210
      %1212 = vst [vmem:[#allocation4] sm:$0x1] %v1211
    $region41: #{tpu_custom_call.1} parent=1 // pred_fallthru
      _
    // Predicated region
    $region42: #{tpu_custom_call.1} parent=1 // pred_check
      _
    $region43: #{tpu_custom_call.1} parent=1 // pred_check_branch
      %1214 = sbr.rel (0) target = $region45
    $region44: #{tpu_custom_call.1} parent=1 // pred_region
      %1216 = vsyncadd [#allocation5], 0
      %s1218 = sshll.u32 [#allocation4], 4
      %s1219 = int_to_ptr.vmem [resolvable:$true] %s1218
      %s1220 = sshll.u32 %s8, 4
      %s1221 = int_to_ptr.hbm [resolvable:$true] %s1220
      %1223 = dma.vmem_to_hbm [thread:$0]  %s1219, 16, %s1221, [#allocation5]
    $region45: #{tpu_custom_call.1} parent=1 // pred_fallthru
      _
    // Predicated region
    $region46: #{tpu_custom_call.1} parent=1 // pred_check
      _
    $region47: #{tpu_custom_call.1} parent=1 // pred_check_branch
      %1225 = sbr.rel (0) target = $region49
    $region48: #{tpu_custom_call.1} parent=1 // pred_region
      %1227 = dma.done [#allocation5], 16
    $region49: #{tpu_custom_call.1} parent=1 // pred_fallthru
      _
    %1228 = vsyncpa [#allocation5], 1

</llo_original>
